<compile_context>
chip_gen: v7x
topology: tpu7x:2x2x1
jax: 0.10.0
libtpu: 0.0.40
codegen_flags: <defaults>
</compile_context>

<pallas_src>
import functools

import jax
import jax.numpy as jnp
import numpy as np
from jax.experimental import pallas as pl
from jax.experimental.pallas import tpu as pltpu


def _cdiv(a, b):
    return -(-a // b)


def _round_up(x, m):
    return _cdiv(x, m) * m


# ----------------------------- chip introspection -------------------------- #
def _num_tensorcores():
    """Best-effort TensorCore count for the local chip (v7x: 2, else 1)."""
    try:
        info = pltpu.get_tpu_info()
        for name in ("num_cores", "core_count", "tensorcores_per_chip", "num_tensorcores"):
            n = getattr(info, name, None)
            if isinstance(n, int) and n > 0:
                return n
    except Exception:
        pass
    try:
        dev = jax.devices()[0]
        n = getattr(dev, "num_cores", None)
        if isinstance(n, int) and n > 0:
            return n
        kind = str(getattr(dev, "device_kind", "")).lower()
        if "v7" in kind:
            return 2
    except Exception:
        pass
    return 1


def _vmem_capacity_bytes():
    try:
        v = int(pltpu.get_tpu_info().vmem_capacity_bytes)
        if v > 0:
            return v
    except Exception:
        pass
    return 64 * 1024 * 1024          # conservative default (v7x-sized VMEM)


# ------------------------------- tile selection ----------------------------- #
def _largest_divisor_mult8(M, cap):
    """Largest multiple of 8 that divides M and is <= cap (None if none)."""
    d = min(M, cap)
    d -= d % 8
    while d >= 8:
        if M % d == 0:
            return d
        d -= 8
    return None


def _choose_tm(M, cap_rows, n_cores):
    """Pick the M-tile.  Prefers tiles that divide M exactly (no wrapper padding)."""
    cap = max(8, cap_rows)
    if M <= cap and n_cores <= 1:
        # single TensorCore: grid is a serial loop, one big full-extent tile wins
        return M
    if n_cores >= 2:
        # dual-TC (v7x): split into a (multiple of n_cores) number of ~<=512-row tiles
        n_steps = _round_up(max(n_cores, _cdiv(M, 512)), n_cores)
        target = min(cap, max(8, _round_up(_cdiv(M, n_steps), 8)))
    else:
        target = min(cap, M)
    tm = _largest_divisor_mult8(M, target)
    if tm is not None:
        return tm
    if M <= cap:
        return M        # no clean split: one tile beats an extra pad/slice HBM pass
    return target        # ragged fallback: wrapper pads x (rare)


# ----------------------------- Pallas kernel ------------------------------ #
def _linear_kernel(x_ref, w_ref, b_ref, o_ref, *, tm, first_rows, head_rows):
    """One M-tile of x @ w + b on the MXU (f32 accumulation).

    w_ref/b_ref hold nw stacked weight sets.  Rows with global index < first_rows
    use set 0 (poseFinal); all other rows use set nw-1 (velFinal for rot_vel).
    """
    i = pl.program_id(0)
    nw = w_ref.shape[0]
    x = x_ref[...]
    if x.dtype != w_ref.dtype:
        x = x.astype(w_ref.dtype)          # per-tile cast (bf16 MXU path); no extra HBM pass

    acc = jnp.dot(x, w_ref[nw - 1], preferred_element_type=jnp.float32) + b_ref[nw - 1]
    o_ref[...] = acc.astype(o_ref.dtype)

    if nw == 2 and first_rows > 0:
        if head_rows is not None:
            # All pose rows live in tile 0: redo only the first `head_rows` rows.
            @pl.when(i == 0)
            def _():
                pose = (jnp.dot(x[:head_rows], w_ref[0],
                                preferred_element_type=jnp.float32) + b_ref[0])
                rows = jax.lax.broadcasted_iota(jnp.int32, pose.shape, 0)
                head = jnp.where(rows < first_rows, pose, acc[:head_rows])
                o_ref[0:head_rows, :] = head.astype(o_ref.dtype)
        else:
            # Rare path (pose rows span multiple tiles): full-tile blend.
            row0 = i * tm

            @pl.when(row0 < first_rows)
            def _():
                pose = (jnp.dot(x, w_ref[0], preferred_element_type=jnp.float32)
                        + b_ref[0])
                rows = row0 + jax.lax.broadcasted_iota(jnp.int32, acc.shape, 0)
                o_ref[...] = jnp.where(rows < first_rows, pose, acc).astype(o_ref.dtype)


def pallas_linear_stacked(x2d, w_stack, b_stack, *, first_rows=0, tm=None,
                          compute_dtype=None):
    """x2d: (M, K), w_stack: (nw, K, N), b_stack: (nw, 1, N) -> (M, N).

    Rows [0, first_rows) use weight set 0, the rest use set nw-1.
    compute_dtype=jnp.bfloat16 runs the MXU in bf16 (f32 accumulation kept); only the
    tiny resident weights are cast in the wrapper, x is cast per-tile in the kernel.
    """
    M, K = x2d.shape
    nw, Kw, N = w_stack.shape
    assert K == Kw and b_stack.shape == (nw, 1, N)
    out_dtype = x2d.dtype

    # Lane-dense output: pad the feature dim of the resident weights/bias (and the output
    # buffer) to a multiple of 128 so stores are unmasked vst, not vst.msk.
    N_pad = _round_up(N, 128)
    if N_pad != N:
        w_stack = jnp.pad(w_stack, ((0, 0), (0, 0), (0, N_pad - N)))
        b_stack = jnp.pad(b_stack, ((0, 0), (0, 0), (0, N_pad - N)))

    if compute_dtype is not None:
        w_stack = w_stack.astype(compute_dtype)
    b_stack = b_stack.astype(jnp.float32)   # bias add stays f32 (v5e VPU has no bf16)

    x_bytes = jnp.dtype(x2d.dtype).itemsize
    w_bytes = jnp.dtype(w_stack.dtype).itemsize
    o_bytes = jnp.dtype(out_dtype).itemsize

    n_cores = _num_tensorcores()
    vmem_cap = _vmem_capacity_bytes()
    vmem_budget = max(8 << 20, (vmem_cap * 3) // 8)          # 48 MiB on v5e/v6e, 24 on v7x
    vmem_limit = int(min((vmem_cap * 3) // 4, 96 << 20))     # 96 MiB on v5e/v6e, 48 on v7x

    if tm is None:
        fixed = 2 * nw * K * N_pad * w_bytes + 2 * nw * N_pad * 4   # dbl-buffered w + f32 b
        per_row = 2 * (K * x_bytes + N_pad * o_bytes) + 4 * N_pad   # x/out tiles + f32 acc
        cap_rows = max(8, (vmem_budget - fixed) // per_row)
        tm = _choose_tm(M, cap_rows, n_cores)

    grid_m = _cdiv(M, tm)
    M_pad = grid_m * tm

    head_rows = None
    if nw > 1 and 0 < first_rows <= tm:
        head_rows = min(_round_up(first_rows, 8), tm)

    kernel = functools.partial(_linear_kernel, tm=tm, first_rows=first_rows,
                               head_rows=head_rows)

    x_in = x2d
    if M_pad != M:
        # TODO(synk): ragged fallback (no multiple-of-8 divisor of M fits VMEM); pads x/out.
        x_in = jnp.pad(x2d, ((0, M_pad - M), (0, 0)))

    cost = pl.CostEstimate(
        flops=2 * M_pad * K * N_pad + (2 * (head_rows or 0) * K * N_pad if nw > 1 else 0),
        transcendentals=0,
        bytes_accessed=(M_pad * K * x_bytes + M_pad * N_pad * o_bytes
                        + nw * (K * N_pad * w_bytes + N_pad * 4)),
    )

    out = pl.pallas_call(
        kernel,
        out_shape=jax.ShapeDtypeStruct((M_pad, N_pad), out_dtype),
        grid_spec=pltpu.PrefetchScalarGridSpec(
            num_scalar_prefetch=0,
            grid=(grid_m,),
            in_specs=[
                pl.BlockSpec((tm, K), lambda i: (i, 0)),          # activation tile
                pl.BlockSpec((nw, K, N_pad), lambda i: (0, 0, 0)),  # stacked weights, resident
                pl.BlockSpec((nw, 1, N_pad), lambda i: (0, 0, 0)),  # stacked biases, resident
            ],
            out_specs=pl.BlockSpec((tm, N_pad), lambda i: (i, 0)),
        ),
        compiler_params=pltpu.CompilerParams(
            dimension_semantics=("parallel",),
            vmem_limit_bytes=vmem_limit,
        ),
        cost_estimate=cost,
    )(x_in, w_stack, b_stack)

    if M_pad != M:
        out = out[:M]
    if N_pad != N:
        out = out[:, :N]
    return out


# --------------------------- OutputProcess (JAX) --------------------------- #
def output_process_forward(output, params, *, data_rep, njoints, nfeats,
                           compute_dtype=None):
    """output: (nframes, bs, latent_dim) -> (bs, njoints, nfeats, nframes)."""
    nframes, bs, d = output.shape
    input_feats = njoints * nfeats

    x2d = output.reshape(nframes * bs, d)            # rows are (frame, batch), frame-major

    if data_rep in ("rot6d", "xyz", "hml_vec"):
        w = params["pose_w"][None]                                  # (1, K, N)
        b = params["pose_b"].reshape(1, 1, input_feats)
        first_rows = 0
    elif data_rep == "rot_vel":
        # One fused call: frame-0 rows (first `bs` rows) use poseFinal, rest use velFinal.
        w = jnp.stack([params["pose_w"], params["vel_w"]])          # (2, K, N)
        b = jnp.stack([params["pose_b"], params["vel_b"]]).reshape(2, 1, input_feats)
        first_rows = bs
    else:
        raise ValueError(data_rep)

    y2d = pallas_linear_stacked(x2d, w, b, first_rows=first_rows,
                                compute_dtype=compute_dtype)

    out = y2d.reshape(nframes, bs, njoints, nfeats)
    # TODO(synk): permute left to XLA (see header note about fusing it into out_specs).
    return jnp.transpose(out, (1, 2, 3, 0))          # == .permute(1, 2, 3, 0)


# ------------------------------- reference -------------------------------- #
def output_process_ref(output, params, *, data_rep, njoints, nfeats):
    nframes, bs, d = output.shape
    if data_rep in ("rot6d", "xyz", "hml_vec"):
        out = output @ params["pose_w"] + params["pose_b"]
    elif data_rep == "rot_vel":
        first = output[0:1] @ params["pose_w"] + params["pose_b"]
        vel = output[1:] @ params["vel_w"] + params["vel_b"]
        out = jnp.concatenate([first, vel], axis=0)
    else:
        raise ValueError(data_rep)
    out = out.reshape(nframes, bs, njoints, nfeats)
    return jnp.transpose(out, (1, 2, 3, 0))


# ---------------------------------- main ----------------------------------- #
if __name__ == "__main__":
    # Small, module-consistent shapes.
    nframes, bs = 8, 2
    latent_dim = 32
    njoints, nfeats = 6, 4
    input_feats = njoints * nfeats

    key = jax.random.PRNGKey(0)
    kx, kpw, kpb, kvw, kvb = jax.random.split(key, 5)

    bound = 1.0 / np.sqrt(latent_dim)
    params = {
        "pose_w": jax.random.uniform(kpw, (latent_dim, input_feats),
                                     jnp.float32, -bound, bound),
        "pose_b": jax.random.uniform(kpb, (input_feats,), jnp.float32, -bound, bound),
        "vel_w": jax.random.uniform(kvw, (latent_dim, input_feats),
                                    jnp.float32, -bound, bound),
        "vel_b": jax.random.uniform(kvb, (input_feats,), jnp.float32, -bound, bound),
    }
    x = jax.random.normal(kx, (nframes, bs, latent_dim), jnp.float32)

    ok = True

    # Exact f32 path (matches the PyTorch module semantics).
    for data_rep in ("rot6d", "rot_vel"):
        fwd = functools.partial(output_process_forward, data_rep=data_rep,
                                njoints=njoints, nfeats=nfeats)
        out = jax.block_until_ready(fwd(x, params))
        ref = jax.block_until_ready(
            output_process_ref(x, params, data_rep=data_rep,
                               njoints=njoints, nfeats=nfeats))
        assert out.shape == (bs, njoints, nfeats, nframes), out.shape
        ok = ok and bool(np.allclose(np.asarray(out), np.asarray(ref),
                                     rtol=1e-5, atol=1e-5))

    # Multi-tile path (automatic on dual-TC chips; forced here for coverage).
    x2d = x.reshape(nframes * bs, latent_dim)
    w2 = jnp.stack([params["pose_w"], params["vel_w"]])
    b2 = jnp.stack([params["pose_b"], params["vel_b"]]).reshape(2, 1, input_feats)
    y = jax.block_until_ready(
        pallas_linear_stacked(x2d, w2, b2, first_rows=bs, tm=8))
    ref2d = jnp.concatenate(
        [x2d[:bs] @ params["pose_w"] + params["pose_b"],
         x2d[bs:] @ params["vel_w"] + params["vel_b"]], axis=0)
    ok = ok and bool(np.allclose(np.asarray(y), np.asarray(ref2d),
                                 rtol=1e-5, atol=1e-5))

    # Optional bf16 fast path (bf16 MXU, f32 accumulation); looser tolerance.
    out_bf16 = jax.block_until_ready(
        output_process_forward(x, params, data_rep="rot6d", njoints=njoints,
                               nfeats=nfeats, compute_dtype=jnp.bfloat16))
    ref = jax.block_until_ready(
        output_process_ref(x, params, data_rep="rot6d",
                           njoints=njoints, nfeats=nfeats))
    ok = ok and bool(np.allclose(np.asarray(out_bf16), np.asarray(ref),
                                 rtol=1e-1, atol=1e-1))

    if ok:
        print("KERNEL_OK")
</pallas_src>

<mosaic_0001>
module attributes {stable_mosaic.version = 11 : i64} {
  func.func @_linear_kernel(%arg0: i32, %arg1: memref<16x32xf32, #tpu.memory_space<vmem>>, %arg2: memref<1x32x128xf32, #tpu.memory_space<vmem>>, %arg3: memref<1x1x128xf32, #tpu.memory_space<vmem>>, %arg4: memref<16x128xf32, #tpu.memory_space<vmem>>) attributes {dimension_semantics = [#tpu.dimension_semantics<parallel>], iteration_bounds = array<i64: 1>, scalar_prefetch = 0 : i64, scratch_operands = 0 : i64, tpu.core_type = #tpu.core_type<tc>, window_params = [{transform_indices = @transform_0, window_bounds = array<i64: 16, 32>}, {pipeline_mode = #tpu.pipeline_mode<synchronous>, transform_indices = @transform_1, window_bounds = array<i64: 1, 32, 128>}, {pipeline_mode = #tpu.pipeline_mode<synchronous>, transform_indices = @transform_2, window_bounds = array<i64: 1, 1, 128>}, {transform_indices = @transform_3, window_bounds = array<i64: 16, 128>}]} {
    %c0 = arith.constant 0 : index
    %c0_0 = arith.constant 0 : index
    %0 = vector.load %arg1[%c0, %c0_0] : memref<16x32xf32, #tpu.memory_space<vmem>>, vector<16x32xf32>
    %c0_1 = arith.constant 0 : index
    %c0_2 = arith.constant 0 : index
    %c0_3 = arith.constant 0 : index
    %1 = vector.load %arg2[%c0_1, %c0_2, %c0_3] : memref<1x32x128xf32, #tpu.memory_space<vmem>>, vector<1x32x128xf32>
    %2 = vector.shape_cast %1 : vector<1x32x128xf32> to vector<32x128xf32>
    %cst = arith.constant dense<0.000000e+00> : vector<16x128xf32>
    %3 = tpu.matmul %0, %2, %cst {dimension_numbers = #tpu.dot_dimension_numbers<[1], [0], [0], [1], [0, 0, 1, 1], [], []>} : vector<16x32xf32>, vector<32x128xf32>, vector<16x128xf32> -> vector<16x128xf32>
    %c0_4 = arith.constant 0 : index
    %c0_5 = arith.constant 0 : index
    %c0_6 = arith.constant 0 : index
    %4 = vector.load %arg3[%c0_4, %c0_5, %c0_6] : memref<1x1x128xf32, #tpu.memory_space<vmem>>, vector<1x1x128xf32>
    %5 = vector.shape_cast %4 : vector<1x1x128xf32> to vector<1x128xf32>
    %6 = vector.broadcast %5 : vector<1x128xf32> to vector<16x128xf32>
    %7 = arith.addf %3, %6 : vector<16x128xf32>
    %c0_7 = arith.constant 0 : index
    %c0_8 = arith.constant 0 : index
    %8 = vector.load %arg4[%c0_7, %c0_8] : memref<16x128xf32, #tpu.memory_space<vmem>>, vector<16x128xf32>
    tpu.vector_store %arg4[%c0_7, %c0_8], %7 {strides = array<i32>} : memref<16x128xf32, #tpu.memory_space<vmem>>, vector<16x128xf32>,
    return
  }
  func.func @transform_0(%arg0: i32) -> (i32, i32) {
    %c0_i32 = arith.constant 0 : i32
    %c0_i32_0 = arith.constant 0 : i32
    return %arg0, %c0_i32 : i32, i32
  }
  func.func @transform_1(%arg0: i32) -> (i32, i32, i32) {
    %c0_i32 = arith.constant 0 : i32
    %c0_i32_0 = arith.constant 0 : i32
    %c0_i32_1 = arith.constant 0 : i32
    %c0_i32_2 = arith.constant 0 : i32
    return %c0_i32, %c0_i32_0, %c0_i32_1 : i32, i32, i32
  }
  func.func @transform_2(%arg0: i32) -> (i32, i32, i32) {
    %c0_i32 = arith.constant 0 : i32
    %c0_i32_0 = arith.constant 0 : i32
    %c0_i32_1 = arith.constant 0 : i32
    %c0_i32_2 = arith.constant 0 : i32
    return %c0_i32, %c0_i32_0, %c0_i32_1 : i32, i32, i32
  }
  func.func @transform_3(%arg0: i32) -> (i32, i32) {
    %c0_i32 = arith.constant 0 : i32
    %c0_i32_0 = arith.constant 0 : i32
    return %arg0, %c0_i32 : i32, i32
  }
}

</mosaic_0001>

<llo_original>
// kernel: tpu_custom_call.1
$region0: #{tpu_custom_call.1}
  #allocation0 [shape = 'u32[]', space=smem, size = 0x4, offset = 0x4, fixed_abs, tag = 'smem constant byte address 0x4 - core index']
  #allocation1 [shape = 'u32[144,128]{1,0:T(1,128)}', space=vmem, size = 0x12000, scoped, tag = 'internal scratch']
  %s0 = inlined_call_operand.hbm [shape: f32[16,32], index: 0, kind: input, shape index: {}]
  %s1 = inlined_call_operand.hbm [shape: f32[1,32,128], index: 1, kind: input, shape index: {}]
  %s2 = inlined_call_operand.vmem [shape: f32[1,1,128], index: 2, kind: input, shape index: {}]
  %s3 = inlined_call_operand.hbm [shape: f32[16,128], index: 3, kind: output, shape index: {}]
  %s4 = sld [smem:[#allocation0]]
  $region30: #{tpu_custom_call.1} parent=0
    _
  %s6 = ssub.s32 1, %s4
  %s7 = scalar_select 0, %s6, %s4
  $region1: #{tpu_custom_call.1} parent=0
    #allocation2 [shape = 'u8[8192]{0}', space=vmem, size = 0x2000, scoped, tag = 'input window, operand 0, single buffered']
    #allocation3 [shape = 's32[1]{0}', space=sflag, size = 0x4, scoped, tag = 'scoped memory for tpu_custom_call.1']
    #allocation4 [shape = 's32[1]{0}', space=sflag, size = 0x4, scoped, tag = 'scoped memory for tpu_custom_call.1']
    #allocation5 [shape = 'u8[16384]{0}', space=vmem, size = 0x4000, scoped, tag = 'input window, operand 1, single buffered']
    #allocation6 [shape = 's32[1]{0}', space=sflag, size = 0x4, scoped, tag = 'scoped memory for tpu_custom_call.1']
    #allocation7 [shape = 'u8[8192]{0}', space=vmem, size = 0x2000, scoped, tag = 'output window, operand 0, single buffered']
    %8 = vsyncpa [#allocation3], 0
    %9 = vsyncpa [#allocation6], 0
    %10 = vsyncpa [#allocation4], 0
    // Predicated region
    $region2: #{tpu_custom_call.1} parent=1 // pred_check
      _
    $region3: #{tpu_custom_call.1} parent=1 // pred_check_branch
      %12 = sbr.rel (0) target = $region5
    $region4: #{tpu_custom_call.1} parent=1 // pred_region
      %s14 = ssub.s32 256, 256
      %15 = vsyncadd [#allocation3], %s14
      %s16 = sshll.u32 [#allocation2], 4
      %s17 = int_to_ptr.vmem [resolvable:$true] %s16
      %22 = dma.hbm_to_vmem [thread:$0]  %s0, 256, %s17, [#allocation3], 128, 128, 8
    $region5: #{tpu_custom_call.1} parent=1 // pred_fallthru
      _
    // Predicated region
    $region6: #{tpu_custom_call.1} parent=1 // pred_check
      _
    $region7: #{tpu_custom_call.1} parent=1 // pred_check_branch
      %24 = sbr.rel (0) target = $region9
    $region8: #{tpu_custom_call.1} parent=1 // pred_region
      %s26 = ssub.s32 512, 512
      %27 = vsyncadd [#allocation6], %s26
      %s28 = sshll.u32 [#allocation5], 4
      %s29 = int_to_ptr.vmem [resolvable:$true] %s28
      %34 = dma.hbm_to_vmem [thread:$0]  %s1, 512, %s29, [#allocation6], 128, 128, 8
    $region9: #{tpu_custom_call.1} parent=1 // pred_fallthru
      _
    // Predicated region
    $region10: #{tpu_custom_call.1} parent=1 // pred_check
      _
    $region11: #{tpu_custom_call.1} parent=1 // pred_check_branch
      %36 = sbr.rel (0) target = $region13
    $region12: #{tpu_custom_call.1} parent=1 // pred_region
      _
    $region13: #{tpu_custom_call.1} parent=1 // pred_fallthru
      _
    // Predicated region
    $region14: #{tpu_custom_call.1} parent=1 // pred_check
      _
    $region15: #{tpu_custom_call.1} parent=1 // pred_check_branch
      %38 = sbr.rel (0) target = $region17
    $region16: #{tpu_custom_call.1} parent=1 // pred_region
      %39 = dma.done [#allocation3], 256
    $region17: #{tpu_custom_call.1} parent=1 // pred_fallthru
      _
    // Predicated region
    $region18: #{tpu_custom_call.1} parent=1 // pred_check
      _
    $region19: #{tpu_custom_call.1} parent=1 // pred_check_branch
      %41 = sbr.rel (0) target = $region21
    $region20: #{tpu_custom_call.1} parent=1 // pred_region
      %42 = dma.done [#allocation6], 512
    $region21: #{tpu_custom_call.1} parent=1 // pred_fallthru
      _
    %v43 = vld [vmem:[#allocation2] sm:$0xff]
    %v44 = vld [vmem:[#allocation2 + $0x8] sm:$0xff]
    %v45 = vld [vmem:[#allocation5] sm:$0xff]
    %v46 = vld [vmem:[#allocation5 + $0x8] sm:$0xff]
    %v47 = vld [vmem:[#allocation5 + $0x10] sm:$0xff]
    %v48 = vld [vmem:[#allocation5 + $0x18] sm:$0xff]
    %v49 = vld [vmem:[%s2] sm:$0x1]
    %v51 = vlaneseq
    %v52 = vshrl.u32 %v51, 7
    %v53 = vsub.s32 0, %v52
    %v54 = vrot.slane %v49, %v53
    %vm56 = vcmask 261120
    %v58 = vsel %vm56, %v43, 0
    %v61 = vsel %vm56, %v44, 0
    %63 = vmatprep.subr.mxu0 0.0
    %64 = vmatpush1.msra.mxu0 %v45
    %65 = vmatprep.subr.mxu0 0.0
    %66 = vmatpush1.msra.mxu0 %v46
    %67 = vmatprep.subr.mxu0 0.0
    %68 = vmatpush1.msra.mxu0 %v47
    %69 = vmatprep.subr.mxu0 0.0
    %70 = vmatpush1.msra.mxu0 %v48
    %71 = vmatprep.subr.mxu0 0.0
    %72 = vmatpush1.msra.mxu0 0.0
    %73 = vmatprep.subr.mxu0 0.0
    %74 = vmatpush1.msra.mxu0 0.0
    %75 = vmatprep.subr.mxu0 0.0
    %76 = vmatpush1.msra.mxu0 0.0
    %77 = vmatprep.subr.mxu0 0.0
    %78 = vmatpush1.msra.mxu0 0.0
    %79 = vmatprep.subr.mxu0 0.0
    %80 = vmatpush1.msra.mxu0 0.0
    %81 = vmatprep.subr.mxu0 0.0
    %82 = vmatpush1.msra.mxu0 0.0
    %83 = vmatprep.subr.mxu0 0.0
    %84 = vmatpush1.msra.mxu0 0.0
    %85 = vmatprep.subr.mxu0 0.0
    %86 = vmatpush1.msra.mxu0 0.0
    %87 = vmatprep.subr.mxu0 0.0
    %88 = vmatpush1.msra.mxu0 0.0
    %89 = vmatprep.subr.mxu0 0.0
    %90 = vmatpush1.msra.mxu0 0.0
    %91 = vmatprep.subr.mxu0 0.0
    %92 = vmatpush1.msra.mxu0 0.0
    %93 = vmatprep.subr.mxu0 0.0
    %94 = vmatpush1.msra.mxu0 0.0
    %95 = vmatprep.subr.mxu0 0.0
    %96 = vmatpush1.msra.mxu0 0.0
    %97 = vmatprep.subr.mxu0 0.0
    %98 = vmatpush1.msra.mxu0 0.0
    %99 = vmatprep.subr.mxu0 0.0
    %100 = vmatpush1.msra.mxu0 0.0
    %101 = vmatprep.subr.mxu0 0.0
    %102 = vmatpush1.msra.mxu0 0.0
    %103 = vmatprep.subr.mxu0 0.0
    %104 = vmatpush1.msra.mxu0 0.0
    %105 = vmatprep.subr.mxu0 0.0
    %106 = vmatpush1.msra.mxu0 0.0
    %107 = vmatprep.subr.mxu0 0.0
    %108 = vmatpush1.msra.mxu0 0.0
    %109 = vmatprep.subr.mxu0 0.0
    %110 = vmatpush1.msra.mxu0 0.0
    %111 = vmatprep.subr.mxu0 0.0
    %112 = vmatpush1.msra.mxu0 0.0
    %113 = vmatprep.subr.mxu0 0.0
    %114 = vmatpush1.msra.mxu0 0.0
    %115 = vmatprep.subr.mxu0 0.0
    %116 = vmatpush1.msra.mxu0 0.0
    %117 = vmatprep.subr.mxu0 0.0
    %118 = vmatpush1.msra.mxu0 0.0
    %119 = vmatprep.subr.mxu0 0.0
    %120 = vmatpush1.msra.mxu0 0.0
    %121 = vmatprep.subr.mxu0 0.0
    %122 = vmatpush1.msra.mxu0 0.0
    %123 = vmatprep.subr.mxu0 0.0
    %124 = vmatpush1.msra.mxu0 0.0
    %125 = vmatprep.subr.mxu0 0.0
    %126 = vmatpush1.msra.mxu0 0.0
    %127 = vmatprep.mubr.f32.mxu0 0.0
    %128 = vmatmul.mubr.f32.gmra.mrb[0].mxu0 %v58
    %v129 = vpop.f32.mrb[0].mxu0
    %v130 = vadd.f32 %v54, %v129
    %v131 = vpop.f32.mrb[0].mxu0
    %132 = vmatprep.mubr.f32.mxu0 0.0
    %133 = vmatmul.mubr.f32.gmra.mrb[0].mxu0 %v61
    %v134 = vpop.f32.mrb[0].mxu0
    %v135 = vadd.f32 %v54, %v134
    %v136 = vpop.f32.mrb[0].mxu0
    %137 = vdwg.mxu0
    %138 = vst [vmem:[#allocation7] sm:$0xff] %v130
    %139 = vst [vmem:[#allocation7 + $0x8] sm:$0xff] %v135
    // Predicated region
    $region22: #{tpu_custom_call.1} parent=1 // pred_check
      _
    $region23: #{tpu_custom_call.1} parent=1 // pred_check_branch
      %141 = sbr.rel (0) target = $region25
    $region24: #{tpu_custom_call.1} parent=1 // pred_region
      %s143 = ssub.s32 256, 256
      %144 = vsyncadd [#allocation4], %s143
      %s145 = sshll.u32 [#allocation7], 4
      %s146 = int_to_ptr.vmem [resolvable:$true] %s145
      %151 = dma.vmem_to_hbm [thread:$0]  %s146, 256, %s3, [#allocation4], 128, 128, 8
    $region25: #{tpu_custom_call.1} parent=1 // pred_fallthru
      _
    // Predicated region
    $region26: #{tpu_custom_call.1} parent=1 // pred_check
      _
    $region27: #{tpu_custom_call.1} parent=1 // pred_check_branch
      %153 = sbr.rel (0) target = $region29
    $region28: #{tpu_custom_call.1} parent=1 // pred_region
      %154 = dma.done [#allocation4], 256
    $region29: #{tpu_custom_call.1} parent=1 // pred_fallthru
      _
    %155 = vsyncpa [#allocation3], 1
    %156 = vsyncpa [#allocation6], 1
    %157 = vsyncpa [#allocation4], 1

</llo_original>
